<compile_context>
chip_gen: v7x
topology: tpu7x:2x2x1
jax: 0.10.0
libtpu: 0.0.40
codegen_flags: <defaults>
</compile_context>

<pallas_src>
import functools

import jax
import jax.numpy as jnp
from jax import lax
from jax.experimental import pallas as pl
from jax.experimental.pallas import tpu as pltpu

LANES = 128


def _cnn_kernel(x_ref, w_ref, b_ref, wl_ref, bl_ref, out_ref, *, kernel_heights, c_out):
    B, S, E = x_ref.shape
    P = LANES
    D = max(kernel_heights)
    nb = len(kernel_heights)

    # One fused MXU matmul for every (conv block, kernel row) pair.
    x2 = x_ref[...].reshape(B * S, E)                                   # b-major, s-minor
    y = jnp.dot(x2, w_ref[...], preferred_element_type=jnp.float32)     # (B*S, D*128)
    # 128-aligned lane slices per kernel row -> whole-vreg views, no lane repacking.
    yd = [y[:, d * P:(d + 1) * P].reshape(B, S, P) for d in range(D)]

    bias = b_ref[...]                                                   # (1, 128)
    lane = lax.broadcasted_iota(jnp.int32, (1, P), 1)

    # Sliding window over the leading B axis + bias + ReLU + running max-pool.
    m = jnp.zeros((S, P), jnp.float32)          # relu >= 0, so 0-init is exact
    for h in range(B):                          # static unroll, B is tiny
        valid = [k for k in range(nb) if h + kernel_heights[k] <= B]
        if not valid:
            continue
        c = yd[0][h]
        for d in range(1, D):
            if h + d < B:
                c = c + yd[d][h + d]
        act = jnp.maximum(c + bias, 0.0)        # conv bias + F.relu
        if len(valid) < nb:                     # mask blocks whose window ran off the end
            msk = None
            for k in valid:
                rng = (lane >= k * c_out) & (lane < (k + 1) * c_out)
                msk = rng if msk is None else (msk | rng)
            act = jnp.where(msk, act, 0.0)      # 0 is safe: true max of relu >= 0
        m = jnp.maximum(m, act)                 # max_pool1d over the full window

    m = jnp.maximum(m, 0.0)  # outer F.relu in forward (no-op, kept for fidelity)
    # TODO(synk): nn.Dropout is identity at inference; training-mode RNG dropout not implemented.
    # Lane-dense linear: features already live in lanes 0:3*C (no concat needed);
    # wl/bl zero-padded to 128 lanes -> single dense matmul, unmasked 128-lane store.
    logits = jnp.dot(m, wl_ref[...], preferred_element_type=jnp.float32) + bl_ref[...]
    out_ref[...] = logits.astype(out_ref.dtype)


def cnn_forward(x, params, kernel_heights):
    """x: (batch, num_seq, emb) — same layout as the PyTorch module's input."""
    w1, b1, w2, b2, w3, b3, wl, bl = params
    B, S, E = x.shape
    C = w1.shape[-1]
    out_size = wl.shape[-1]
    P = LANES
    D = max(kernel_heights)
    nb = len(kernel_heights)

    # --- wrapper-side weight packing (tiny arrays; negligible cost) ------------
    # W_all[:, d*128 + k*C : d*128 + (k+1)*C] = w_k[d]   (zero where kh_k <= d)
    W_all = jnp.zeros((E, D * P), jnp.float32)
    for k, (w, kh) in enumerate(zip((w1, w2, w3), kernel_heights)):
        for d in range(kh):
            W_all = W_all.at[:, d * P + k * C: d * P + (k + 1) * C].set(w[d])
    b_all = jnp.zeros((1, P), jnp.float32)
    for k, b in enumerate((b1, b2, b3)):
        b_all = b_all.at[:, k * C:(k + 1) * C].set(b)
    wl_p = jnp.zeros((P, P), jnp.float32).at[:nb * C, :out_size].set(wl)
    bl_p = jnp.zeros((1, P), jnp.float32).at[:, :out_size].set(bl)

    def full_spec(shape):
        n = len(shape)
        return pl.BlockSpec(shape, lambda i, _n=n: (0,) * _n)

    kernel = functools.partial(_cnn_kernel,
                               kernel_heights=tuple(kernel_heights), c_out=C)

    # NOTE: at these toy shapes the whole problem fits one grid step; if S (num_seq)
    # grows in production, tile S with a real grid + dimension_semantics=("parallel",)
    # to use both v7x TensorCores and to stay under the 32 MiB scoped VMEM.
    out = pl.pallas_call(
        kernel,
        out_shape=jax.ShapeDtypeStruct((S, P), jnp.float32),
        grid=(1,),
        in_specs=[full_spec(x.shape),
                  full_spec(W_all.shape), full_spec(b_all.shape),
                  full_spec(wl_p.shape), full_spec(bl_p.shape)],
        out_specs=full_spec((S, P)),
        compiler_params=pltpu.CompilerParams(dimension_semantics=("arbitrary",)),
    )(x, W_all, b_all, wl_p, bl_p)

    return out[:, :out_size]                    # drop lane padding outside the kernel


def cnn_reference(x, params, kernel_heights):
    """Pure-JAX reference reproducing the PyTorch forward (eval mode)."""
    w1, b1, w2, b2, w3, b3, wl, bl = params
    xp = jnp.transpose(x, (1, 0, 2))            # (S, B, E)
    S, B, E = xp.shape

    def block(w, b, kh):
        h_out = B - kh + 1
        c_out = w.shape[-1]
        rows = []
        for h in range(h_out):
            win = xp[:, h:h + kh, :].reshape(S, kh * E)
            rows.append(win @ w.reshape(kh * E, c_out))
        conv = jnp.stack(rows, axis=1) + b      # (S, h_out, C_out)
        return jnp.max(jax.nn.relu(conv), axis=1)

    feats = jnp.concatenate(
        [block(w1, b1, kernel_heights[0]),
         block(w2, b2, kernel_heights[1]),
         block(w3, b3, kernel_heights[2])], axis=1)
    feats = jax.nn.relu(feats)
    return feats @ wl + bl


def init_params(key, kernel_heights, emb, out_channels, output_size):
    ks = jax.random.split(key, 8)
    scale = 0.1
    w1 = scale * jax.random.normal(ks[0], (kernel_heights[0], emb, out_channels), jnp.float32)
    w2 = scale * jax.random.normal(ks[1], (kernel_heights[1], emb, out_channels), jnp.float32)
    w3 = scale * jax.random.normal(ks[2], (kernel_heights[2], emb, out_channels), jnp.float32)
    b1 = scale * jax.random.normal(ks[3], (1, out_channels), jnp.float32)
    b2 = scale * jax.random.normal(ks[4], (1, out_channels), jnp.float32)
    b3 = scale * jax.random.normal(ks[5], (1, out_channels), jnp.float32)
    # nn.Linear weight is (out, in); stored pre-transposed as (in, out).
    wl = scale * jax.random.normal(ks[6], (3 * out_channels, output_size), jnp.float32)
    bl = scale * jax.random.normal(ks[7], (1, output_size), jnp.float32)
    return (w1, b1, w2, b2, w3, b3, wl, bl)


if __name__ == "__main__":
    output_size = 6
    kernel_heights = (1, 2, 3)
    embedding_length = 32
    out_channels = 4

    # Input: (batch_size, num_seq, embedding_length)
    batch, num_seq = 8, 16
    key = jax.random.PRNGKey(0)
    k_x, k_p = jax.random.split(key)
    x = jax.random.normal(k_x, (batch, num_seq, embedding_length), jnp.float32)
    params = init_params(k_p, kernel_heights, embedding_length, out_channels, output_size)

    logits = cnn_forward(x, params, kernel_heights)
    logits = jax.block_until_ready(logits)

    ref = cnn_reference(x, params, kernel_heights)
    assert logits.shape == (num_seq, output_size), logits.shape
    assert jnp.allclose(logits, ref, atol=1e-4, rtol=1e-4), (
        float(jnp.max(jnp.abs(logits - ref))))

    print("KERNEL_OK")
</pallas_src>

<mosaic_0001>
module attributes {stable_mosaic.version = 11 : i64} {
  func.func @_cnn_kernel(%arg0: i32, %arg1: memref<8x16x32xf32, #tpu.memory_space<vmem>>, %arg2: memref<32x384xf32, #tpu.memory_space<vmem>>, %arg3: memref<1x128xf32, #tpu.memory_space<vmem>>, %arg4: memref<128x128xf32, #tpu.memory_space<vmem>>, %arg5: memref<1x128xf32, #tpu.memory_space<vmem>>, %arg6: memref<16x128xf32, #tpu.memory_space<vmem>>) attributes {dimension_semantics = [#tpu.dimension_semantics<arbitrary>], iteration_bounds = array<i64: 1>, scalar_prefetch = 0 : i64, scratch_operands = 0 : i64, tpu.core_type = #tpu.core_type<tc>, window_params = [{pipeline_mode = #tpu.pipeline_mode<synchronous>, transform_indices = @transform_0, window_bounds = array<i64: 8, 16, 32>}, {pipeline_mode = #tpu.pipeline_mode<synchronous>, transform_indices = @transform_1, window_bounds = array<i64: 32, 384>}, {pipeline_mode = #tpu.pipeline_mode<synchronous>, transform_indices = @transform_2, window_bounds = array<i64: 1, 128>}, {pipeline_mode = #tpu.pipeline_mode<synchronous>, transform_indices = @transform_3, window_bounds = array<i64: 128, 128>}, {pipeline_mode = #tpu.pipeline_mode<synchronous>, transform_indices = @transform_4, window_bounds = array<i64: 1, 128>}, {pipeline_mode = #tpu.pipeline_mode<synchronous>, transform_indices = @transform_5, window_bounds = array<i64: 16, 128>}]} {
    %c0 = arith.constant 0 : index
    %c0_0 = arith.constant 0 : index
    %c0_1 = arith.constant 0 : index
    %0 = vector.load %arg1[%c0, %c0_0, %c0_1] : memref<8x16x32xf32, #tpu.memory_space<vmem>>, vector<8x16x32xf32>
    %1 = vector.shape_cast %0 : vector<8x16x32xf32> to vector<128x32xf32>
    %c0_2 = arith.constant 0 : index
    %c0_3 = arith.constant 0 : index
    %2 = vector.load %arg2[%c0_2, %c0_3] : memref<32x384xf32, #tpu.memory_space<vmem>>, vector<32x384xf32>
    %cst = arith.constant dense<0.000000e+00> : vector<128x384xf32>
    %3 = tpu.matmul %1, %2, %cst {dimension_numbers = #tpu.dot_dimension_numbers<[1], [0], [0], [1], [0, 0, 1, 1], [], []>} : vector<128x32xf32>, vector<32x384xf32>, vector<128x384xf32> -> vector<128x384xf32>
    %4 = vector.extract_strided_slice %3 {offsets = [0, 0], sizes = [128, 128], strides = [1, 1]} : vector<128x384xf32> to vector<128x128xf32>
    %5 = vector.shape_cast %4 : vector<128x128xf32> to vector<8x16x128xf32>
    %6 = vector.extract_strided_slice %3 {offsets = [0, 128], sizes = [128, 128], strides = [1, 1]} : vector<128x384xf32> to vector<128x128xf32>
    %7 = vector.shape_cast %6 : vector<128x128xf32> to vector<8x16x128xf32>
    %8 = vector.extract_strided_slice %3 {offsets = [0, 256], sizes = [128, 128], strides = [1, 1]} : vector<128x384xf32> to vector<128x128xf32>
    %9 = vector.shape_cast %8 : vector<128x128xf32> to vector<8x16x128xf32>
    %c0_4 = arith.constant 0 : index
    %c0_5 = arith.constant 0 : index
    %10 = vector.load %arg3[%c0_4, %c0_5] : memref<1x128xf32, #tpu.memory_space<vmem>>, vector<1x128xf32>
    %11 = tpu.iota {dimensions = array<i32: 1>} : vector<1x128xi32>
    %cst_6 = arith.constant 0.000000e+00 : f32
    %12 = vector.broadcast %cst_6 : f32 to vector<16x128xf32>
    %13 = vector.extract_strided_slice %5 {offsets = [0, 0, 0], sizes = [1, 16, 128], strides = [1, 1, 1]} : vector<8x16x128xf32> to vector<1x16x128xf32>
    %14 = vector.shape_cast %13 : vector<1x16x128xf32> to vector<16x128xf32>
    %15 = vector.extract_strided_slice %7 {offsets = [1, 0, 0], sizes = [1, 16, 128], strides = [1, 1, 1]} : vector<8x16x128xf32> to vector<1x16x128xf32>
    %16 = vector.shape_cast %15 : vector<1x16x128xf32> to vector<16x128xf32>
    %17 = arith.addf %14, %16 : vector<16x128xf32>
    %18 = vector.extract_strided_slice %9 {offsets = [2, 0, 0], sizes = [1, 16, 128], strides = [1, 1, 1]} : vector<8x16x128xf32> to vector<1x16x128xf32>
    %19 = vector.shape_cast %18 : vector<1x16x128xf32> to vector<16x128xf32>
    %20 = arith.addf %17, %19 : vector<16x128xf32>
    %21 = vector.broadcast %10 : vector<1x128xf32> to vector<16x128xf32>
    %22 = arith.addf %20, %21 : vector<16x128xf32>
    %cst_7 = arith.constant 0.000000e+00 : f32
    %23 = vector.broadcast %cst_7 : f32 to vector<16x128xf32>
    %24 = arith.maximumf %22, %23 : vector<16x128xf32>
    %25 = arith.maximumf %12, %24 : vector<16x128xf32>
    %26 = vector.extract_strided_slice %5 {offsets = [1, 0, 0], sizes = [1, 16, 128], strides = [1, 1, 1]} : vector<8x16x128xf32> to vector<1x16x128xf32>
    %27 = vector.shape_cast %26 : vector<1x16x128xf32> to vector<16x128xf32>
    %28 = vector.extract_strided_slice %7 {offsets = [2, 0, 0], sizes = [1, 16, 128], strides = [1, 1, 1]} : vector<8x16x128xf32> to vector<1x16x128xf32>
    %29 = vector.shape_cast %28 : vector<1x16x128xf32> to vector<16x128xf32>
    %30 = arith.addf %27, %29 : vector<16x128xf32>
    %31 = vector.extract_strided_slice %9 {offsets = [3, 0, 0], sizes = [1, 16, 128], strides = [1, 1, 1]} : vector<8x16x128xf32> to vector<1x16x128xf32>
    %32 = vector.shape_cast %31 : vector<1x16x128xf32> to vector<16x128xf32>
    %33 = arith.addf %30, %32 : vector<16x128xf32>
    %34 = vector.broadcast %10 : vector<1x128xf32> to vector<16x128xf32>
    %35 = arith.addf %33, %34 : vector<16x128xf32>
    %cst_8 = arith.constant 0.000000e+00 : f32
    %36 = vector.broadcast %cst_8 : f32 to vector<16x128xf32>
    %37 = arith.maximumf %35, %36 : vector<16x128xf32>
    %38 = arith.maximumf %25, %37 : vector<16x128xf32>
    %39 = vector.extract_strided_slice %5 {offsets = [2, 0, 0], sizes = [1, 16, 128], strides = [1, 1, 1]} : vector<8x16x128xf32> to vector<1x16x128xf32>
    %40 = vector.shape_cast %39 : vector<1x16x128xf32> to vector<16x128xf32>
    %41 = vector.extract_strided_slice %7 {offsets = [3, 0, 0], sizes = [1, 16, 128], strides = [1, 1, 1]} : vector<8x16x128xf32> to vector<1x16x128xf32>
    %42 = vector.shape_cast %41 : vector<1x16x128xf32> to vector<16x128xf32>
    %43 = arith.addf %40, %42 : vector<16x128xf32>
    %44 = vector.extract_strided_slice %9 {offsets = [4, 0, 0], sizes = [1, 16, 128], strides = [1, 1, 1]} : vector<8x16x128xf32> to vector<1x16x128xf32>
    %45 = vector.shape_cast %44 : vector<1x16x128xf32> to vector<16x128xf32>
    %46 = arith.addf %43, %45 : vector<16x128xf32>
    %47 = vector.broadcast %10 : vector<1x128xf32> to vector<16x128xf32>
    %48 = arith.addf %46, %47 : vector<16x128xf32>
    %cst_9 = arith.constant 0.000000e+00 : f32
    %49 = vector.broadcast %cst_9 : f32 to vector<16x128xf32>
    %50 = arith.maximumf %48, %49 : vector<16x128xf32>
    %51 = arith.maximumf %38, %50 : vector<16x128xf32>
    %52 = vector.extract_strided_slice %5 {offsets = [3, 0, 0], sizes = [1, 16, 128], strides = [1, 1, 1]} : vector<8x16x128xf32> to vector<1x16x128xf32>
    %53 = vector.shape_cast %52 : vector<1x16x128xf32> to vector<16x128xf32>
    %54 = vector.extract_strided_slice %7 {offsets = [4, 0, 0], sizes = [1, 16, 128], strides = [1, 1, 1]} : vector<8x16x128xf32> to vector<1x16x128xf32>
    %55 = vector.shape_cast %54 : vector<1x16x128xf32> to vector<16x128xf32>
    %56 = arith.addf %53, %55 : vector<16x128xf32>
    %57 = vector.extract_strided_slice %9 {offsets = [5, 0, 0], sizes = [1, 16, 128], strides = [1, 1, 1]} : vector<8x16x128xf32> to vector<1x16x128xf32>
    %58 = vector.shape_cast %57 : vector<1x16x128xf32> to vector<16x128xf32>
    %59 = arith.addf %56, %58 : vector<16x128xf32>
    %60 = vector.broadcast %10 : vector<1x128xf32> to vector<16x128xf32>
    %61 = arith.addf %59, %60 : vector<16x128xf32>
    %cst_10 = arith.constant 0.000000e+00 : f32
    %62 = vector.broadcast %cst_10 : f32 to vector<16x128xf32>
    %63 = arith.maximumf %61, %62 : vector<16x128xf32>
    %64 = arith.maximumf %51, %63 : vector<16x128xf32>
    %65 = vector.extract_strided_slice %5 {offsets = [4, 0, 0], sizes = [1, 16, 128], strides = [1, 1, 1]} : vector<8x16x128xf32> to vector<1x16x128xf32>
    %66 = vector.shape_cast %65 : vector<1x16x128xf32> to vector<16x128xf32>
    %67 = vector.extract_strided_slice %7 {offsets = [5, 0, 0], sizes = [1, 16, 128], strides = [1, 1, 1]} : vector<8x16x128xf32> to vector<1x16x128xf32>
    %68 = vector.shape_cast %67 : vector<1x16x128xf32> to vector<16x128xf32>
    %69 = arith.addf %66, %68 : vector<16x128xf32>
    %70 = vector.extract_strided_slice %9 {offsets = [6, 0, 0], sizes = [1, 16, 128], strides = [1, 1, 1]} : vector<8x16x128xf32> to vector<1x16x128xf32>
    %71 = vector.shape_cast %70 : vector<1x16x128xf32> to vector<16x128xf32>
    %72 = arith.addf %69, %71 : vector<16x128xf32>
    %73 = vector.broadcast %10 : vector<1x128xf32> to vector<16x128xf32>
    %74 = arith.addf %72, %73 : vector<16x128xf32>
    %cst_11 = arith.constant 0.000000e+00 : f32
    %75 = vector.broadcast %cst_11 : f32 to vector<16x128xf32>
    %76 = arith.maximumf %74, %75 : vector<16x128xf32>
    %77 = arith.maximumf %64, %76 : vector<16x128xf32>
    %78 = vector.extract_strided_slice %5 {offsets = [5, 0, 0], sizes = [1, 16, 128], strides = [1, 1, 1]} : vector<8x16x128xf32> to vector<1x16x128xf32>
    %79 = vector.shape_cast %78 : vector<1x16x128xf32> to vector<16x128xf32>
    %80 = vector.extract_strided_slice %7 {offsets = [6, 0, 0], sizes = [1, 16, 128], strides = [1, 1, 1]} : vector<8x16x128xf32> to vector<1x16x128xf32>
    %81 = vector.shape_cast %80 : vector<1x16x128xf32> to vector<16x128xf32>
    %82 = arith.addf %79, %81 : vector<16x128xf32>
    %83 = vector.extract_strided_slice %9 {offsets = [7, 0, 0], sizes = [1, 16, 128], strides = [1, 1, 1]} : vector<8x16x128xf32> to vector<1x16x128xf32>
    %84 = vector.shape_cast %83 : vector<1x16x128xf32> to vector<16x128xf32>
    %85 = arith.addf %82, %84 : vector<16x128xf32>
    %86 = vector.broadcast %10 : vector<1x128xf32> to vector<16x128xf32>
    %87 = arith.addf %85, %86 : vector<16x128xf32>
    %cst_12 = arith.constant 0.000000e+00 : f32
    %88 = vector.broadcast %cst_12 : f32 to vector<16x128xf32>
    %89 = arith.maximumf %87, %88 : vector<16x128xf32>
    %90 = arith.maximumf %77, %89 : vector<16x128xf32>
    %91 = vector.extract_strided_slice %5 {offsets = [6, 0, 0], sizes = [1, 16, 128], strides = [1, 1, 1]} : vector<8x16x128xf32> to vector<1x16x128xf32>
    %92 = vector.shape_cast %91 : vector<1x16x128xf32> to vector<16x128xf32>
    %93 = vector.extract_strided_slice %7 {offsets = [7, 0, 0], sizes = [1, 16, 128], strides = [1, 1, 1]} : vector<8x16x128xf32> to vector<1x16x128xf32>
    %94 = vector.shape_cast %93 : vector<1x16x128xf32> to vector<16x128xf32>
    %95 = arith.addf %92, %94 : vector<16x128xf32>
    %96 = vector.broadcast %10 : vector<1x128xf32> to vector<16x128xf32>
    %97 = arith.addf %95, %96 : vector<16x128xf32>
    %cst_13 = arith.constant 0.000000e+00 : f32
    %98 = vector.broadcast %cst_13 : f32 to vector<16x128xf32>
    %99 = arith.maximumf %97, %98 : vector<16x128xf32>
    %c0_i32 = arith.constant 0 : i32
    %100 = vector.broadcast %c0_i32 : i32 to vector<1x128xi32>
    %101 = arith.cmpi sge, %11, %100 : vector<1x128xi32>
    %c4_i32 = arith.constant 4 : i32
    %102 = vector.broadcast %c4_i32 : i32 to vector<1x128xi32>
    %103 = arith.cmpi slt, %11, %102 : vector<1x128xi32>
    %104 = arith.andi %101, %103 : vector<1x128xi1>
    %c4_i32_14 = arith.constant 4 : i32
    %105 = vector.broadcast %c4_i32_14 : i32 to vector<1x128xi32>
    %106 = arith.cmpi sge, %11, %105 : vector<1x128xi32>
    %c8_i32 = arith.constant 8 : i32
    %107 = vector.broadcast %c8_i32 : i32 to vector<1x128xi32>
    %108 = arith.cmpi slt, %11, %107 : vector<1x128xi32>
    %109 = arith.andi %106, %108 : vector<1x128xi1>
    %110 = arith.ori %104, %109 : vector<1x128xi1>
    %cst_15 = arith.constant 0.000000e+00 : f32
    %111 = vector.shape_cast %110 : vector<1x128xi1> to vector<1x128xi1>
    %112 = vector.broadcast %111 : vector<1x128xi1> to vector<16x128xi1>
    %113 = vector.broadcast %cst_15 : f32 to vector<16x128xf32>
    %114 = arith.select %112, %99, %113 : vector<16x128xi1>, vector<16x128xf32>
    %115 = arith.maximumf %90, %114 : vector<16x128xf32>
    %116 = vector.extract_strided_slice %5 {offsets = [7, 0, 0], sizes = [1, 16, 128], strides = [1, 1, 1]} : vector<8x16x128xf32> to vector<1x16x128xf32>
    %117 = vector.shape_cast %116 : vector<1x16x128xf32> to vector<16x128xf32>
    %118 = vector.broadcast %10 : vector<1x128xf32> to vector<16x128xf32>
    %119 = arith.addf %117, %118 : vector<16x128xf32>
    %cst_16 = arith.constant 0.000000e+00 : f32
    %120 = vector.broadcast %cst_16 : f32 to vector<16x128xf32>
    %121 = arith.maximumf %119, %120 : vector<16x128xf32>
    %c0_i32_17 = arith.constant 0 : i32
    %122 = vector.broadcast %c0_i32_17 : i32 to vector<1x128xi32>
    %123 = arith.cmpi sge, %11, %122 : vector<1x128xi32>
    %c4_i32_18 = arith.constant 4 : i32
    %124 = vector.broadcast %c4_i32_18 : i32 to vector<1x128xi32>
    %125 = arith.cmpi slt, %11, %124 : vector<1x128xi32>
    %126 = arith.andi %123, %125 : vector<1x128xi1>
    %cst_19 = arith.constant 0.000000e+00 : f32
    %127 = vector.shape_cast %126 : vector<1x128xi1> to vector<1x128xi1>
    %128 = vector.broadcast %127 : vector<1x128xi1> to vector<16x128xi1>
    %129 = vector.broadcast %cst_19 : f32 to vector<16x128xf32>
    %130 = arith.select %128, %121, %129 : vector<16x128xi1>, vector<16x128xf32>
    %131 = arith.maximumf %115, %130 : vector<16x128xf32>
    %cst_20 = arith.constant 0.000000e+00 : f32
    %132 = vector.broadcast %cst_20 : f32 to vector<16x128xf32>
    %133 = arith.maximumf %131, %132 : vector<16x128xf32>
    %c0_21 = arith.constant 0 : index
    %c0_22 = arith.constant 0 : index
    %134 = vector.load %arg4[%c0_21, %c0_22] : memref<128x128xf32, #tpu.memory_space<vmem>>, vector<128x128xf32>
    %cst_23 = arith.constant dense<0.000000e+00> : vector<16x128xf32>
    %135 = tpu.matmul %133, %134, %cst_23 {dimension_numbers = #tpu.dot_dimension_numbers<[1], [0], [0], [1], [0, 0, 1, 1], [], []>} : vector<16x128xf32>, vector<128x128xf32>, vector<16x128xf32> -> vector<16x128xf32>
    %c0_24 = arith.constant 0 : index
    %c0_25 = arith.constant 0 : index
    %136 = vector.load %arg5[%c0_24, %c0_25] : memref<1x128xf32, #tpu.memory_space<vmem>>, vector<1x128xf32>
    %137 = vector.broadcast %136 : vector<1x128xf32> to vector<16x128xf32>
    %138 = arith.addf %135, %137 : vector<16x128xf32>
    %c0_26 = arith.constant 0 : index
    %c0_27 = arith.constant 0 : index
    %139 = vector.load %arg6[%c0_26, %c0_27] : memref<16x128xf32, #tpu.memory_space<vmem>>, vector<16x128xf32>
    tpu.vector_store %arg6[%c0_26, %c0_27], %138 {strides = array<i32>} : memref<16x128xf32, #tpu.memory_space<vmem>>, vector<16x128xf32>,
    return
  }
  func.func @transform_0(%arg0: i32) -> (i32, i32, i32) {
    %c0_i32 = arith.constant 0 : i32
    %c0_i32_0 = arith.constant 0 : i32
    %c0_i32_1 = arith.constant 0 : i32
    %c0_i32_2 = arith.constant 0 : i32
    return %c0_i32, %c0_i32_0, %c0_i32_1 : i32, i32, i32
  }
  func.func @transform_1(%arg0: i32) -> (i32, i32) {
    %c0_i32 = arith.constant 0 : i32
    %c0_i32_0 = arith.constant 0 : i32
    %c0_i32_1 = arith.constant 0 : i32
    return %c0_i32, %c0_i32_0 : i32, i32
  }
  func.func @transform_2(%arg0: i32) -> (i32, i32) {
    %c0_i32 = arith.constant 0 : i32
    %c0_i32_0 = arith.constant 0 : i32
    %c0_i32_1 = arith.constant 0 : i32
    return %c0_i32, %c0_i32_0 : i32, i32
  }
  func.func @transform_3(%arg0: i32) -> (i32, i32) {
    %c0_i32 = arith.constant 0 : i32
    %c0_i32_0 = arith.constant 0 : i32
    %c0_i32_1 = arith.constant 0 : i32
    return %c0_i32, %c0_i32_0 : i32, i32
  }
  func.func @transform_4(%arg0: i32) -> (i32, i32) {
    %c0_i32 = arith.constant 0 : i32
    %c0_i32_0 = arith.constant 0 : i32
    %c0_i32_1 = arith.constant 0 : i32
    return %c0_i32, %c0_i32_0 : i32, i32
  }
  func.func @transform_5(%arg0: i32) -> (i32, i32) {
    %c0_i32 = arith.constant 0 : i32
    %c0_i32_0 = arith.constant 0 : i32
    %c0_i32_1 = arith.constant 0 : i32
    return %c0_i32, %c0_i32_0 : i32, i32
  }
}

</mosaic_0001>

<llo_original>
// kernel: tpu_custom_call.1
$region0: #{tpu_custom_call.1}
  #allocation0 [shape = 'u32[]', space=smem, size = 0x4, offset = 0x4, fixed_abs, tag = 'smem constant byte address 0x4 - core index']
  #allocation1 [shape = 'u32[144,128]{1,0:T(1,128)}', space=vmem, size = 0x12000, scoped, tag = 'internal scratch']
  %s0 = inlined_call_operand.hbm [shape: f32[8,16,32], index: 0, kind: input, shape index: {}]
  %s1 = inlined_call_operand.hbm [shape: f32[32,384], index: 1, kind: input, shape index: {}]
  %s2 = inlined_call_operand.vmem [shape: f32[1,128], index: 2, kind: input, shape index: {}]
  %s3 = inlined_call_operand.hbm [shape: f32[128,128], index: 3, kind: input, shape index: {}]
  %s4 = inlined_call_operand.vmem [shape: f32[1,128], index: 4, kind: input, shape index: {}]
  %s5 = inlined_call_operand.hbm [shape: f32[16,128], index: 5, kind: output, shape index: {}]
  %s6 = sld [smem:[#allocation0]]
  $region42: #{tpu_custom_call.1} parent=0
    _
  %s8 = ssub.s32 1, %s6
  %s9 = scalar_select 0, %s8, %s6
  $region1: #{tpu_custom_call.1} parent=0
    #allocation2 [shape = 'u8[65536]{0}', space=vmem, size = 0x10000, scoped, tag = 'input window, operand 0, single buffered']
    #allocation3 [shape = 's32[1]{0}', space=sflag, size = 0x4, scoped, tag = 'scoped memory for tpu_custom_call.1']
    #allocation4 [shape = 's32[1]{0}', space=sflag, size = 0x4, scoped, tag = 'scoped memory for tpu_custom_call.1']
    #allocation5 [shape = 'u8[49152]{0}', space=vmem, size = 0xc000, scoped, tag = 'input window, operand 1, single buffered']
    #allocation6 [shape = 's32[1]{0}', space=sflag, size = 0x4, scoped, tag = 'scoped memory for tpu_custom_call.1']
    #allocation7 [shape = 'u8[65536]{0}', space=vmem, size = 0x10000, scoped, tag = 'input window, operand 3, single buffered']
    #allocation8 [shape = 'u8[8192]{0}', space=vmem, size = 0x2000, scoped, tag = 'output window, operand 0, single buffered']
    %10 = vsyncpa [#allocation3], 0
    %11 = vsyncpa [#allocation6], 0
    %12 = vsyncpa [#allocation4], 0
    // Predicated region
    $region2: #{tpu_custom_call.1} parent=1 // pred_check
      _
    $region3: #{tpu_custom_call.1} parent=1 // pred_check_branch
      %14 = sbr.rel (0) target = $region5
    $region4: #{tpu_custom_call.1} parent=1 // pred_region
      %s16 = ssub.s32 2048, 2048
      %17 = vsyncadd [#allocation3], %s16
      %s18 = sshll.u32 [#allocation2], 4
      %s19 = int_to_ptr.vmem [resolvable:$true] %s18
      %24 = dma.hbm_to_vmem [thread:$0]  %s0, 2048, %s19, [#allocation3], 128, 128, 8
    $region5: #{tpu_custom_call.1} parent=1 // pred_fallthru
      _
    // Predicated region
    $region6: #{tpu_custom_call.1} parent=1 // pred_check
      _
    $region7: #{tpu_custom_call.1} parent=1 // pred_check_branch
      %26 = sbr.rel (0) target = $region9
    $region8: #{tpu_custom_call.1} parent=1 // pred_region
      %s28 = ssub.s32 1536, 1536
      %29 = vsyncadd [#allocation6], %s28
      %s30 = sshll.u32 [#allocation5], 4
      %s31 = int_to_ptr.vmem [resolvable:$true] %s30
      %36 = dma.hbm_to_vmem [thread:$0]  %s1, 1536, %s31, [#allocation6], 384, 384, 24
    $region9: #{tpu_custom_call.1} parent=1 // pred_fallthru
      _
    // Predicated region
    $region10: #{tpu_custom_call.1} parent=1 // pred_check
      _
    $region11: #{tpu_custom_call.1} parent=1 // pred_check_branch
      %38 = sbr.rel (0) target = $region13
    $region12: #{tpu_custom_call.1} parent=1 // pred_region
      _
    $region13: #{tpu_custom_call.1} parent=1 // pred_fallthru
      _
    // Predicated region
    $region14: #{tpu_custom_call.1} parent=1 // pred_check
      _
    $region15: #{tpu_custom_call.1} parent=1 // pred_check_branch
      %40 = sbr.rel (0) target = $region17
    $region16: #{tpu_custom_call.1} parent=1 // pred_region
      %s42 = ssub.s32 2048, 2048
      %43 = vsyncadd [#allocation6], %s42
      %s44 = sshll.u32 [#allocation7], 4
      %s45 = int_to_ptr.vmem [resolvable:$true] %s44
      %50 = dma.hbm_to_vmem [thread:$0]  %s3, 2048, %s45, [#allocation6], 128, 128, 8
    $region17: #{tpu_custom_call.1} parent=1 // pred_fallthru
      _
    // Predicated region
    $region18: #{tpu_custom_call.1} parent=1 // pred_check
      _
    $region19: #{tpu_custom_call.1} parent=1 // pred_check_branch
      %52 = sbr.rel (0) target = $region21
    $region20: #{tpu_custom_call.1} parent=1 // pred_region
      _
    $region21: #{tpu_custom_call.1} parent=1 // pred_fallthru
      _
    // Predicated region
    $region22: #{tpu_custom_call.1} parent=1 // pred_check
      _
    $region23: #{tpu_custom_call.1} parent=1 // pred_check_branch
      %54 = sbr.rel (0) target = $region25
    $region24: #{tpu_custom_call.1} parent=1 // pred_region
      %55 = dma.done [#allocation3], 2048
    $region25: #{tpu_custom_call.1} parent=1 // pred_fallthru
      _
    // Predicated region
    $region26: #{tpu_custom_call.1} parent=1 // pred_check
      _
    $region27: #{tpu_custom_call.1} parent=1 // pred_check_branch
      %57 = sbr.rel (0) target = $region29
    $region28: #{tpu_custom_call.1} parent=1 // pred_region
      %58 = dma.done [#allocation6], 1536
    $region29: #{tpu_custom_call.1} parent=1 // pred_fallthru
      _
    // Predicated region
    $region30: #{tpu_custom_call.1} parent=1 // pred_check
      _
    $region31: #{tpu_custom_call.1} parent=1 // pred_check_branch
      %60 = sbr.rel (0) target = $region33
    $region32: #{tpu_custom_call.1} parent=1 // pred_region
      %61 = dma.done [#allocation6], 2048
    $region33: #{tpu_custom_call.1} parent=1 // pred_fallthru
      _
    %v62 = vld [vmem:[#allocation2] sm:$0xff]
    %v63 = vld [vmem:[#allocation2 + $0x8] sm:$0xff]
    %v64 = vld [vmem:[#allocation2 + $0x10] sm:$0xff]
    %v65 = vld [vmem:[#allocation2 + $0x18] sm:$0xff]
    %v66 = vld [vmem:[#allocation2 + $0x20] sm:$0xff]
    %v67 = vld [vmem:[#allocation2 + $0x28] sm:$0xff]
    %v68 = vld [vmem:[#allocation2 + $0x30] sm:$0xff]
    %v69 = vld [vmem:[#allocation2 + $0x38] sm:$0xff]
    %v70 = vld [vmem:[#allocation2 + $0x40] sm:$0xff]
    %v71 = vld [vmem:[#allocation2 + $0x48] sm:$0xff]
    %v72 = vld [vmem:[#allocation2 + $0x50] sm:$0xff]
    %v73 = vld [vmem:[#allocation2 + $0x58] sm:$0xff]
    %v74 = vld [vmem:[#allocation2 + $0x60] sm:$0xff]
    %v75 = vld [vmem:[#allocation2 + $0x68] sm:$0xff]
    %v76 = vld [vmem:[#allocation2 + $0x70] sm:$0xff]
    %v77 = vld [vmem:[#allocation2 + $0x78] sm:$0xff]
    %v78 = vld [vmem:[#allocation5] sm:$0xff]
    %v79 = vld [vmem:[#allocation5 + $0x8] sm:$0xff]
    %v80 = vld [vmem:[#allocation5 + $0x10] sm:$0xff]
    %v81 = vld [vmem:[#allocation5 + $0x18] sm:$0xff]
    %v82 = vld [vmem:[#allocation5 + $0x20] sm:$0xff]
    %v83 = vld [vmem:[#allocation5 + $0x28] sm:$0xff]
    %v84 = vld [vmem:[#allocation5 + $0x30] sm:$0xff]
    %v85 = vld [vmem:[#allocation5 + $0x38] sm:$0xff]
    %v86 = vld [vmem:[#allocation5 + $0x40] sm:$0xff]
    %v87 = vld [vmem:[#allocation5 + $0x48] sm:$0xff]
    %v88 = vld [vmem:[#allocation5 + $0x50] sm:$0xff]
    %v89 = vld [vmem:[#allocation5 + $0x58] sm:$0xff]
    %vm90 = vcmask 261120
    %v92 = vsel %vm90, %v62, 0
    %v95 = vsel %vm90, %v63, 0
    %v98 = vsel %vm90, %v64, 0
    %v101 = vsel %vm90, %v65, 0
    %v104 = vsel %vm90, %v66, 0
    %v107 = vsel %vm90, %v67, 0
    %v110 = vsel %vm90, %v68, 0
    %v113 = vsel %vm90, %v69, 0
    %v116 = vsel %vm90, %v70, 0
    %v119 = vsel %vm90, %v71, 0
    %v122 = vsel %vm90, %v72, 0
    %v125 = vsel %vm90, %v73, 0
    %v128 = vsel %vm90, %v74, 0
    %v131 = vsel %vm90, %v75, 0
    %v134 = vsel %vm90, %v76, 0
    %v137 = vsel %vm90, %v77, 0
    %139 = vmatprep.subr.mxu0 %v79
    %140 = vmatpush1.msra.mxu0 %v78
    %141 = vmatprep.subr.mxu0 %v82
    %142 = vmatpush1.msra.mxu0 %v81
    %143 = vmatprep.subr.mxu0 %v85
    %144 = vmatpush1.msra.mxu0 %v84
    %145 = vmatprep.subr.mxu0 %v88
    %146 = vmatpush1.msra.mxu0 %v87
    %147 = vmatprep.subr.mxu0 0.0
    %148 = vmatpush1.msra.mxu0 0.0
    %149 = vmatprep.subr.mxu0 0.0
    %150 = vmatpush1.msra.mxu0 0.0
    %151 = vmatprep.subr.mxu0 0.0
    %152 = vmatpush1.msra.mxu0 0.0
    %153 = vmatprep.subr.mxu0 0.0
    %154 = vmatpush1.msra.mxu0 0.0
    %155 = vmatprep.subr.mxu0 0.0
    %156 = vmatpush1.msra.mxu0 0.0
    %157 = vmatprep.subr.mxu0 0.0
    %158 = vmatpush1.msra.mxu0 0.0
    %159 = vmatprep.subr.mxu0 0.0
    %160 = vmatpush1.msra.mxu0 0.0
    %161 = vmatprep.subr.mxu0 0.0
    %162 = vmatpush1.msra.mxu0 0.0
    %163 = vmatprep.subr.mxu0 0.0
    %164 = vmatpush1.msra.mxu0 0.0
    %165 = vmatprep.subr.mxu0 0.0
    %166 = vmatpush1.msra.mxu0 0.0
    %167 = vmatprep.subr.mxu0 0.0
    %168 = vmatpush1.msra.mxu0 0.0
    %169 = vmatprep.subr.mxu0 0.0
    %170 = vmatpush1.msra.mxu0 0.0
    %171 = vmatprep.subr.mxu0 0.0
    %172 = vmatpush1.msra.mxu0 0.0
    %173 = vmatprep.subr.mxu0 0.0
    %174 = vmatpush1.msra.mxu0 0.0
    %175 = vmatprep.subr.mxu0 0.0
    %176 = vmatpush1.msra.mxu0 0.0
    %177 = vmatprep.subr.mxu0 0.0
    %178 = vmatpush1.msra.mxu0 0.0
    %179 = vmatprep.subr.mxu0 0.0
    %180 = vmatpush1.msra.mxu0 0.0
    %181 = vmatprep.subr.mxu0 0.0
    %182 = vmatpush1.msra.mxu0 0.0
    %183 = vmatprep.subr.mxu0 0.0
    %184 = vmatpush1.msra.mxu0 0.0
    %185 = vmatprep.subr.mxu0 0.0
    %186 = vmatpush1.msra.mxu0 0.0
    %187 = vmatprep.subr.mxu0 0.0
    %188 = vmatpush1.msra.mxu0 0.0
    %189 = vmatprep.subr.mxu0 0.0
    %190 = vmatpush1.msra.mxu0 0.0
    %191 = vmatprep.subr.mxu0 0.0
    %192 = vmatpush1.msra.mxu0 0.0
    %193 = vmatprep.subr.mxu0 0.0
    %194 = vmatpush1.msra.mxu0 0.0
    %195 = vmatprep.subr.mxu0 0.0
    %196 = vmatpush1.msra.mxu0 0.0
    %197 = vmatprep.subr.mxu0 0.0
    %198 = vmatpush1.msra.mxu0 0.0
    %199 = vmatprep.subr.mxu0 0.0
    %200 = vmatpush1.msra.mxu0 0.0
    %201 = vmatprep.subr.mxu0 0.0
    %202 = vmatpush1.msra.mxu0 0.0
    %203 = vmatprep.mubr.f32.mxu0 0.0
    %204 = vmatmul.mubr.f32.gmra.mrb[0].mxu0 %v92
    %v205 = vpop.f32.mrb[0].mxu0
    %v206 = vadd.f32 0.0, %v205
    %v207 = vpop.f32.mrb[0].mxu0
    %208 = vmatprep.mubr.f32.mxu0 0.0
    %209 = vmatmul.mubr.f32.gmra.mrb[0].mxu0 %v95
    %v210 = vpop.f32.mrb[0].mxu0
    %v211 = vadd.f32 0.0, %v210
    %v212 = vpop.f32.mrb[0].mxu0
    %213 = vmatprep.mubr.f32.mxu0 0.0
    %214 = vmatmul.mubr.f32.gmra.mrb[0].mxu0 %v98
    %v215 = vpop.f32.mrb[0].mxu0
    %v216 = vadd.f32 0.0, %v215
    %v217 = vpop.f32.mrb[0].mxu0
    %v218 = vadd.f32 0.0, %v217
    %219 = vmatprep.mubr.f32.mxu0 0.0
    %220 = vmatmul.mubr.f32.gmra.mrb[0].mxu0 %v101
    %v221 = vpop.f32.mrb[0].mxu0
    %v222 = vadd.f32 0.0, %v221
    %v223 = vpop.f32.mrb[0].mxu0
    %v224 = vadd.f32 0.0, %v223
    %225 = vmatprep.mubr.f32.mxu0 0.0
    %226 = vmatmul.mubr.f32.gmra.mrb[0].mxu0 %v104
    %v227 = vpop.f32.mrb[0].mxu0
    %v228 = vadd.f32 0.0, %v227
    %v229 = vpop.f32.mrb[0].mxu0
    %v230 = vadd.f32 0.0, %v229
    %231 = vmatprep.mubr.f32.mxu0 0.0
    %232 = vmatmul.mubr.f32.gmra.mrb[0].mxu0 %v107
    %v233 = vpop.f32.mrb[0].mxu0
    %v234 = vadd.f32 0.0, %v233
    %v235 = vpop.f32.mrb[0].mxu0
    %v236 = vadd.f32 0.0, %v235
    %237 = vmatprep.mubr.f32.mxu0 0.0
    %238 = vmatmul.mubr.f32.gmra.mrb[0].mxu0 %v110
    %v239 = vpop.f32.mrb[0].mxu0
    %v240 = vadd.f32 0.0, %v239
    %v241 = vpop.f32.mrb[0].mxu0
    %v242 = vadd.f32 0.0, %v241
    %243 = vmatprep.mubr.f32.mxu0 0.0
    %244 = vmatmul.mubr.f32.gmra.mrb[0].mxu0 %v113
    %v245 = vpop.f32.mrb[0].mxu0
    %v246 = vadd.f32 0.0, %v245
    %v247 = vpop.f32.mrb[0].mxu0
    %v248 = vadd.f32 0.0, %v247
    %249 = vmatprep.mubr.f32.mxu0 0.0
    %250 = vmatmul.mubr.f32.gmra.mrb[0].mxu0 %v116
    %v251 = vpop.f32.mrb[0].mxu0
    %v252 = vadd.f32 0.0, %v251
    %v253 = vpop.f32.mrb[0].mxu0
    %v254 = vadd.f32 0.0, %v253
    %255 = vmatprep.mubr.f32.mxu0 0.0
    %256 = vmatmul.mubr.f32.gmra.mrb[0].mxu0 %v119
    %v257 = vpop.f32.mrb[0].mxu0
    %v258 = vadd.f32 0.0, %v257
    %v259 = vpop.f32.mrb[0].mxu0
    %v260 = vadd.f32 0.0, %v259
    %261 = vmatprep.mubr.f32.mxu0 0.0
    %262 = vmatmul.mubr.f32.gmra.mrb[0].mxu0 %v122
    %v263 = vpop.f32.mrb[0].mxu0
    %v264 = vadd.f32 0.0, %v263
    %v265 = vpop.f32.mrb[0].mxu0
    %v266 = vadd.f32 0.0, %v265
    %267 = vmatprep.mubr.f32.mxu0 0.0
    %268 = vmatmul.mubr.f32.gmra.mrb[0].mxu0 %v125
    %v269 = vpop.f32.mrb[0].mxu0
    %v270 = vadd.f32 0.0, %v269
    %v271 = vpop.f32.mrb[0].mxu0
    %v272 = vadd.f32 0.0, %v271
    %273 = vmatprep.mubr.f32.mxu0 0.0
    %274 = vmatmul.mubr.f32.gmra.mrb[0].mxu0 %v128
    %v275 = vpop.f32.mrb[0].mxu0
    %v276 = vadd.f32 0.0, %v275
    %v277 = vpop.f32.mrb[0].mxu0
    %v278 = vadd.f32 0.0, %v277
    %279 = vmatprep.mubr.f32.mxu0 0.0
    %280 = vmatmul.mubr.f32.gmra.mrb[0].mxu0 %v131
    %v281 = vpop.f32.mrb[0].mxu0
    %v282 = vadd.f32 0.0, %v281
    %v283 = vpop.f32.mrb[0].mxu0
    %v284 = vadd.f32 0.0, %v283
    %285 = vmatprep.mubr.f32.mxu0 0.0
    %286 = vmatmul.mubr.f32.gmra.mrb[0].mxu0 %v134
    %v287 = vpop.f32.mrb[0].mxu0
    %v288 = vadd.f32 0.0, %v287
    %v289 = vpop.f32.mrb[0].mxu0
    %v290 = vadd.f32 0.0, %v289
    %291 = vmatprep.mubr.f32.mxu0 0.0
    %292 = vmatmul.mubr.f32.gmra.mrb[0].mxu0 %v137
    %v293 = vpop.f32.mrb[0].mxu0
    %v294 = vadd.f32 0.0, %v293
    %v295 = vpop.f32.mrb[0].mxu0
    %v296 = vadd.f32 0.0, %v295
    %297 = vdwg.mxu0
    %298 = vmatprep.subr.mxu0 0.0
    %299 = vmatpush1.msra.mxu0 %v80
    %300 = vmatprep.subr.mxu0 0.0
    %301 = vmatpush1.msra.mxu0 %v83
    %302 = vmatprep.subr.mxu0 0.0
    %303 = vmatpush1.msra.mxu0 %v86
    %304 = vmatprep.subr.mxu0 0.0
    %305 = vmatpush1.msra.mxu0 %v89
    %306 = vmatprep.subr.mxu0 0.0
    %307 = vmatpush1.msra.mxu0 0.0
    %308 = vmatprep.subr.mxu0 0.0
    %309 = vmatpush1.msra.mxu0 0.0
    %310 = vmatprep.subr.mxu0 0.0
    %311 = vmatpush1.msra.mxu0 0.0
    %312 = vmatprep.subr.mxu0 0.0
    %313 = vmatpush1.msra.mxu0 0.0
    %314 = vmatprep.subr.mxu0 0.0
    %315 = vmatpush1.msra.mxu0 0.0
    %316 = vmatprep.subr.mxu0 0.0
    %317 = vmatpush1.msra.mxu0 0.0
    %318 = vmatprep.subr.mxu0 0.0
    %319 = vmatpush1.msra.mxu0 0.0
    %320 = vmatprep.subr.mxu0 0.0
    %321 = vmatpush1.msra.mxu0 0.0
    %322 = vmatprep.subr.mxu0 0.0
    %323 = vmatpush1.msra.mxu0 0.0
    %324 = vmatprep.subr.mxu0 0.0
    %325 = vmatpush1.msra.mxu0 0.0
    %326 = vmatprep.subr.mxu0 0.0
    %327 = vmatpush1.msra.mxu0 0.0
    %328 = vmatprep.subr.mxu0 0.0
    %329 = vmatpush1.msra.mxu0 0.0
    %330 = vmatprep.subr.mxu0 0.0
    %331 = vmatpush1.msra.mxu0 0.0
    %332 = vmatprep.subr.mxu0 0.0
    %333 = vmatpush1.msra.mxu0 0.0
    %334 = vmatprep.subr.mxu0 0.0
    %335 = vmatpush1.msra.mxu0 0.0
    %336 = vmatprep.subr.mxu0 0.0
    %337 = vmatpush1.msra.mxu0 0.0
    %338 = vmatprep.subr.mxu0 0.0
    %339 = vmatpush1.msra.mxu0 0.0
    %340 = vmatprep.subr.mxu0 0.0
    %341 = vmatpush1.msra.mxu0 0.0
    %342 = vmatprep.subr.mxu0 0.0
    %343 = vmatpush1.msra.mxu0 0.0
    %344 = vmatprep.subr.mxu0 0.0
    %345 = vmatpush1.msra.mxu0 0.0
    %346 = vmatprep.subr.mxu0 0.0
    %347 = vmatpush1.msra.mxu0 0.0
    %348 = vmatprep.subr.mxu0 0.0
    %349 = vmatpush1.msra.mxu0 0.0
    %350 = vmatprep.subr.mxu0 0.0
    %351 = vmatpush1.msra.mxu0 0.0
    %352 = vmatprep.subr.mxu0 0.0
    %353 = vmatpush1.msra.mxu0 0.0
    %354 = vmatprep.subr.mxu0 0.0
    %355 = vmatpush1.msra.mxu0 0.0
    %356 = vmatprep.subr.mxu0 0.0
    %357 = vmatpush1.msra.mxu0 0.0
    %358 = vmatprep.subr.mxu0 0.0
    %359 = vmatpush1.msra.mxu0 0.0
    %360 = vmatprep.subr.mxu0 0.0
    %361 = vmatpush1.msra.mxu0 0.0
    %362 = vmatprep.mubr.f32.mxu0 0.0
    %363 = vmatmul.mubr.f32.gmra.mrb[0].mxu0 %v92
    %v364 = vpop.f32.mrb[0].mxu0
    %v365 = vpop.f32.mrb[0].mxu0
    %366 = vmatprep.mubr.f32.mxu0 0.0
    %367 = vmatmul.mubr.f32.gmra.mrb[0].mxu0 %v95
    %v368 = vpop.f32.mrb[0].mxu0
    %v369 = vpop.f32.mrb[0].mxu0
    %370 = vmatprep.mubr.f32.mxu0 0.0
    %371 = vmatmul.mubr.f32.gmra.mrb[0].mxu0 %v98
    %v372 = vpop.f32.mrb[0].mxu0
    %v373 = vpop.f32.mrb[0].mxu0
    %374 = vmatprep.mubr.f32.mxu0 0.0
    %375 = vmatmul.mubr.f32.gmra.mrb[0].mxu0 %v101
    %v376 = vpop.f32.mrb[0].mxu0
    %v377 = vpop.f32.mrb[0].mxu0
    %378 = vmatprep.mubr.f32.mxu0 0.0
    %379 = vmatmul.mubr.f32.gmra.mrb[0].mxu0 %v104
    %v380 = vpop.f32.mrb[0].mxu0
    %v381 = vadd.f32 0.0, %v380
    %v382 = vpop.f32.mrb[0].mxu0
    %383 = vmatprep.mubr.f32.mxu0 0.0
    %384 = vmatmul.mubr.f32.gmra.mrb[0].mxu0 %v107
    %v385 = vpop.f32.mrb[0].mxu0
    %v386 = vadd.f32 0.0, %v385
    %v387 = vpop.f32.mrb[0].mxu0
    %388 = vmatprep.mubr.f32.mxu0 0.0
    %389 = vmatmul.mubr.f32.gmra.mrb[0].mxu0 %v110
    %v390 = vpop.f32.mrb[0].mxu0
    %v391 = vadd.f32 0.0, %v390
    %v392 = vpop.f32.mrb[0].mxu0
    %393 = vmatprep.mubr.f32.mxu0 0.0
    %394 = vmatmul.mubr.f32.gmra.mrb[0].mxu0 %v113
    %v395 = vpop.f32.mrb[0].mxu0
    %v396 = vadd.f32 0.0, %v395
    %v397 = vpop.f32.mrb[0].mxu0
    %398 = vmatprep.mubr.f32.mxu0 0.0
    %399 = vmatmul.mubr.f32.gmra.mrb[0].mxu0 %v116
    %v400 = vpop.f32.mrb[0].mxu0
    %v401 = vadd.f32 0.0, %v400
    %v402 = vpop.f32.mrb[0].mxu0
    %403 = vmatprep.mubr.f32.mxu0 0.0
    %404 = vmatmul.mubr.f32.gmra.mrb[0].mxu0 %v119
    %v405 = vpop.f32.mrb[0].mxu0
    %v406 = vadd.f32 0.0, %v405
    %v407 = vpop.f32.mrb[0].mxu0
    %408 = vmatprep.mubr.f32.mxu0 0.0
    %409 = vmatmul.mubr.f32.gmra.mrb[0].mxu0 %v122
    %v410 = vpop.f32.mrb[0].mxu0
    %v411 = vadd.f32 0.0, %v410
    %v412 = vpop.f32.mrb[0].mxu0
    %413 = vmatprep.mubr.f32.mxu0 0.0
    %414 = vmatmul.mubr.f32.gmra.mrb[0].mxu0 %v125
    %v415 = vpop.f32.mrb[0].mxu0
    %v416 = vadd.f32 0.0, %v415
    %v417 = vpop.f32.mrb[0].mxu0
    %418 = vmatprep.mubr.f32.mxu0 0.0
    %419 = vmatmul.mubr.f32.gmra.mrb[0].mxu0 %v128
    %v420 = vpop.f32.mrb[0].mxu0
    %v421 = vadd.f32 0.0, %v420
    %v422 = vpop.f32.mrb[0].mxu0
    %423 = vmatprep.mubr.f32.mxu0 0.0
    %424 = vmatmul.mubr.f32.gmra.mrb[0].mxu0 %v131
    %v425 = vpop.f32.mrb[0].mxu0
    %v426 = vadd.f32 0.0, %v425
    %v427 = vpop.f32.mrb[0].mxu0
    %428 = vmatprep.mubr.f32.mxu0 0.0
    %429 = vmatmul.mubr.f32.gmra.mrb[0].mxu0 %v134
    %v430 = vpop.f32.mrb[0].mxu0
    %v431 = vadd.f32 0.0, %v430
    %v432 = vpop.f32.mrb[0].mxu0
    %433 = vmatprep.mubr.f32.mxu0 0.0
    %434 = vmatmul.mubr.f32.gmra.mrb[0].mxu0 %v137
    %v435 = vpop.f32.mrb[0].mxu0
    %v436 = vadd.f32 0.0, %v435
    %v437 = vpop.f32.mrb[0].mxu0
    %438 = vdwg.mxu0
    %v439 = vld [vmem:[%s2] sm:$0x1]
    %v440 = vlaneseq
    %v441 = vand.u32 %v440, 127
    %v442 = vadd.f32 %v206, %v218
    %v443 = vadd.f32 %v211, %v224
    %v444 = vadd.f32 %v442, %v381
    %v445 = vadd.f32 %v443, %v386
    %v447 = vlaneseq
    %v448 = vshrl.u32 %v447, 7
    %v449 = vsub.s32 0, %v448
    %v450 = vrot.slane %v439, %v449
    %v452 = vadd.f32 %v444, %v450
    %v453 = vadd.f32 %v445, %v450
    %v454 = vmax.f32 %v452, 0.0
    %v455 = vmax.f32 %v453, 0.0
    %v456 = vmax.f32 %v454, 0.0
    %v457 = vmax.f32 %v455, 0.0
    %v458 = vadd.f32 %v216, %v230
    %v459 = vadd.f32 %v222, %v236
    %v460 = vadd.f32 %v458, %v391
    %v461 = vadd.f32 %v459, %v396
    %v462 = vadd.f32 %v460, %v450
    %v463 = vadd.f32 %v461, %v450
    %v464 = vmax.f32 %v462, 0.0
    %v465 = vmax.f32 %v463, 0.0
    %v466 = vmax.f32 %v456, %v464
    %v467 = vmax.f32 %v457, %v465
    %v468 = vadd.f32 %v228, %v242
    %v469 = vadd.f32 %v234, %v248
    %v470 = vadd.f32 %v468, %v401
    %v471 = vadd.f32 %v469, %v406
    %v472 = vadd.f32 %v470, %v450
    %v473 = vadd.f32 %v471, %v450
    %v474 = vmax.f32 %v472, 0.0
    %v475 = vmax.f32 %v473, 0.0
    %v476 = vmax.f32 %v466, %v474
    %v477 = vmax.f32 %v467, %v475
    %v478 = vadd.f32 %v240, %v254
    %v479 = vadd.f32 %v246, %v260
    %v480 = vadd.f32 %v478, %v411
    %v481 = vadd.f32 %v479, %v416
    %v482 = vadd.f32 %v480, %v450
    %v483 = vadd.f32 %v481, %v450
    %v484 = vmax.f32 %v482, 0.0
    %v485 = vmax.f32 %v483, 0.0
    %v486 = vmax.f32 %v476, %v484
    %v487 = vmax.f32 %v477, %v485
    %v488 = vadd.f32 %v252, %v266
    %v489 = vadd.f32 %v258, %v272
    %v490 = vadd.f32 %v488, %v421
    %v491 = vadd.f32 %v489, %v426
    %v492 = vadd.f32 %v490, %v450
    %v493 = vadd.f32 %v491, %v450
    %v494 = vmax.f32 %v492, 0.0
    %v495 = vmax.f32 %v493, 0.0
    %v496 = vmax.f32 %v486, %v494
    %v497 = vmax.f32 %v487, %v495
    %v498 = vadd.f32 %v264, %v278
    %v499 = vadd.f32 %v270, %v284
    %v500 = vadd.f32 %v498, %v431
    %v501 = vadd.f32 %v499, %v436
    %v502 = vadd.f32 %v500, %v450
    %v503 = vadd.f32 %v501, %v450
    %v504 = vmax.f32 %v502, 0.0
    %v505 = vmax.f32 %v503, 0.0
    %v506 = vmax.f32 %v496, %v504
    %v507 = vmax.f32 %v497, %v505
    %v508 = vadd.f32 %v276, %v290
    %v509 = vadd.f32 %v282, %v296
    %v510 = vadd.f32 %v508, %v450
    %v511 = vadd.f32 %v509, %v450
    %v512 = vmax.f32 %v510, 0.0
    %v513 = vmax.f32 %v511, 0.0
    %vm514 = vcmp.ge.s32.totalorder %v441, 0
    %vm515 = vcmp.lt.s32.totalorder %v441, 4
    %vm516 = vmand %vm514, %vm515
    %vm517 = vcmp.ge.s32.totalorder %v441, 4
    %vm518 = vcmp.lt.s32.totalorder %v441, 8
    %vm519 = vmand %vm517, %vm518
    %vm520 = vmor %vm516, %vm519
    %v521 = vsel %vm520, 1, 0
    %vm522 = vcmp.eq.s32.totalorder %v521, 1
    %v523 = vsel %vm522, %v512, 0.0
    %v524 = vsel %vm522, %v513, 0.0
    %v525 = vmax.f32 %v506, %v523
    %v526 = vmax.f32 %v507, %v524
    %v527 = vadd.f32 %v288, %v450
    %v528 = vadd.f32 %v294, %v450
    %v529 = vmax.f32 %v527, 0.0
    %v530 = vmax.f32 %v528, 0.0
    %v531 = vsel %vm516, 1, 0
    %vm532 = vcmp.eq.s32.totalorder %v531, 1
    %v533 = vsel %vm532, %v529, 0.0
    %v534 = vsel %vm532, %v530, 0.0
    %v535 = vmax.f32 %v525, %v533
    %v536 = vmax.f32 %v526, %v534
    %v537 = vmax.f32 %v535, 0.0
    %v538 = vmax.f32 %v536, 0.0
    %v539 = vld [vmem:[#allocation7] sm:$0xff]
    %v540 = vld [vmem:[#allocation7 + $0x8] sm:$0xff]
    %v541 = vld [vmem:[#allocation7 + $0x10] sm:$0xff]
    %v542 = vld [vmem:[#allocation7 + $0x18] sm:$0xff]
    %v543 = vld [vmem:[#allocation7 + $0x20] sm:$0xff]
    %v544 = vld [vmem:[#allocation7 + $0x28] sm:$0xff]
    %v545 = vld [vmem:[#allocation7 + $0x30] sm:$0xff]
    %v546 = vld [vmem:[#allocation7 + $0x38] sm:$0xff]
    %v547 = vld [vmem:[#allocation7 + $0x40] sm:$0xff]
    %v548 = vld [vmem:[#allocation7 + $0x48] sm:$0xff]
    %v549 = vld [vmem:[#allocation7 + $0x50] sm:$0xff]
    %v550 = vld [vmem:[#allocation7 + $0x58] sm:$0xff]
    %v551 = vld [vmem:[#allocation7 + $0x60] sm:$0xff]
    %v552 = vld [vmem:[#allocation7 + $0x68] sm:$0xff]
    %v553 = vld [vmem:[#allocation7 + $0x70] sm:$0xff]
    %v554 = vld [vmem:[#allocation7 + $0x78] sm:$0xff]
    %v555 = vld [vmem:[%s4] sm:$0x1]
    %v557 = vlaneseq
    %v558 = vshrl.u32 %v557, 7
    %v559 = vsub.s32 0, %v558
    %v560 = vrot.slane %v555, %v559
    %562 = vmatprep.subr.mxu0 0.0
    %563 = vmatpush1.msra.mxu0 %v539
    %564 = vmatprep.subr.mxu0 0.0
    %565 = vmatpush1.msra.mxu0 %v540
    %566 = vmatprep.subr.mxu0 0.0
    %567 = vmatpush1.msra.mxu0 %v541
    %568 = vmatprep.subr.mxu0 0.0
    %569 = vmatpush1.msra.mxu0 %v542
    %570 = vmatprep.subr.mxu0 0.0
    %571 = vmatpush1.msra.mxu0 %v543
    %572 = vmatprep.subr.mxu0 0.0
    %573 = vmatpush1.msra.mxu0 %v544
    %574 = vmatprep.subr.mxu0 0.0
    %575 = vmatpush1.msra.mxu0 %v545
    %576 = vmatprep.subr.mxu0 0.0
    %577 = vmatpush1.msra.mxu0 %v546
    %578 = vmatprep.subr.mxu0 0.0
    %579 = vmatpush1.msra.mxu0 %v547
    %580 = vmatprep.subr.mxu0 0.0
    %581 = vmatpush1.msra.mxu0 %v548
    %582 = vmatprep.subr.mxu0 0.0
    %583 = vmatpush1.msra.mxu0 %v549
    %584 = vmatprep.subr.mxu0 0.0
    %585 = vmatpush1.msra.mxu0 %v550
    %586 = vmatprep.subr.mxu0 0.0
    %587 = vmatpush1.msra.mxu0 %v551
    %588 = vmatprep.subr.mxu0 0.0
    %589 = vmatpush1.msra.mxu0 %v552
    %590 = vmatprep.subr.mxu0 0.0
    %591 = vmatpush1.msra.mxu0 %v553
    %592 = vmatprep.subr.mxu0 0.0
    %593 = vmatpush1.msra.mxu0 %v554
    %594 = vmatprep.subr.mxu0 0.0
    %595 = vmatpush1.msra.mxu0 0.0
    %596 = vmatprep.subr.mxu0 0.0
    %597 = vmatpush1.msra.mxu0 0.0
    %598 = vmatprep.subr.mxu0 0.0
    %599 = vmatpush1.msra.mxu0 0.0
    %600 = vmatprep.subr.mxu0 0.0
    %601 = vmatpush1.msra.mxu0 0.0
    %602 = vmatprep.subr.mxu0 0.0
    %603 = vmatpush1.msra.mxu0 0.0
    %604 = vmatprep.subr.mxu0 0.0
    %605 = vmatpush1.msra.mxu0 0.0
    %606 = vmatprep.subr.mxu0 0.0
    %607 = vmatpush1.msra.mxu0 0.0
    %608 = vmatprep.subr.mxu0 0.0
    %609 = vmatpush1.msra.mxu0 0.0
    %610 = vmatprep.subr.mxu0 0.0
    %611 = vmatpush1.msra.mxu0 0.0
    %612 = vmatprep.subr.mxu0 0.0
    %613 = vmatpush1.msra.mxu0 0.0
    %614 = vmatprep.subr.mxu0 0.0
    %615 = vmatpush1.msra.mxu0 0.0
    %616 = vmatprep.subr.mxu0 0.0
    %617 = vmatpush1.msra.mxu0 0.0
    %618 = vmatprep.subr.mxu0 0.0
    %619 = vmatpush1.msra.mxu0 0.0
    %620 = vmatprep.subr.mxu0 0.0
    %621 = vmatpush1.msra.mxu0 0.0
    %622 = vmatprep.subr.mxu0 0.0
    %623 = vmatpush1.msra.mxu0 0.0
    %624 = vmatprep.subr.mxu0 0.0
    %625 = vmatpush1.msra.mxu0 0.0
    %626 = vmatprep.mubr.f32.mxu0 0.0
    %627 = vmatmul.mubr.f32.gmra.mrb[0].mxu0 %v537
    %v628 = vpop.f32.mrb[0].mxu0
    %v629 = vadd.f32 %v560, %v628
    %v630 = vpop.f32.mrb[0].mxu0
    %631 = vmatprep.mubr.f32.mxu0 0.0
    %632 = vmatmul.mubr.f32.gmra.mrb[0].mxu0 %v538
    %v633 = vpop.f32.mrb[0].mxu0
    %v634 = vadd.f32 %v560, %v633
    %v635 = vpop.f32.mrb[0].mxu0
    %636 = vdwg.mxu0
    %637 = vst [vmem:[#allocation8] sm:$0xff] %v629
    %638 = vst [vmem:[#allocation8 + $0x8] sm:$0xff] %v634
    // Predicated region
    $region34: #{tpu_custom_call.1} parent=1 // pred_check
      _
    $region35: #{tpu_custom_call.1} parent=1 // pred_check_branch
      %640 = sbr.rel (0) target = $region37
    $region36: #{tpu_custom_call.1} parent=1 // pred_region
      %s642 = ssub.s32 256, 256
      %643 = vsyncadd [#allocation4], %s642
      %s644 = sshll.u32 [#allocation8], 4
      %s645 = int_to_ptr.vmem [resolvable:$true] %s644
      %650 = dma.vmem_to_hbm [thread:$0]  %s645, 256, %s5, [#allocation4], 128, 128, 8
    $region37: #{tpu_custom_call.1} parent=1 // pred_fallthru
      _
    // Predicated region
    $region38: #{tpu_custom_call.1} parent=1 // pred_check
      _
    $region39: #{tpu_custom_call.1} parent=1 // pred_check_branch
      %652 = sbr.rel (0) target = $region41
    $region40: #{tpu_custom_call.1} parent=1 // pred_region
      %653 = dma.done [#allocation4], 256
    $region41: #{tpu_custom_call.1} parent=1 // pred_fallthru
      _
    %654 = vsyncpa [#allocation3], 1
    %655 = vsyncpa [#allocation6], 1
    %656 = vsyncpa [#allocation4], 1

</llo_original>
